<compile_context>
chip_gen: v5e
topology: v5e:2x2
jax: 0.10.0
libtpu: 0.0.40
codegen_flags: <defaults>
</compile_context>

<pallas_src>
import functools
import math

import jax
import jax.numpy as jnp
from jax.experimental import pallas as pl
from jax.experimental.pallas import tpu as pltpu

_NEG_INF = -1e30  # finite "minus infinity" so masked blocks never produce NaN


# --------------------------------------------------------------------------
# Kernel 1: LayerNorm + fused QKV projection (runs once per row of x)
# --------------------------------------------------------------------------
def _ln_qkv_kernel(x_ref, gamma_ref, beta_ref, wqkv_ref,
                   q_ref, k_ref, v_ref, *, inner, eps):
    x = x_ref[0].astype(jnp.float32)                       # (tr, D)
    gamma = gamma_ref[0].astype(jnp.float32)               # (D,)
    beta = beta_ref[0].astype(jnp.float32)                 # (D,)

    mean = jnp.mean(x, axis=-1, keepdims=True)
    cen = x - mean
    var = jnp.mean(cen * cen, axis=-1, keepdims=True)
    xn = (cen * jax.lax.rsqrt(var + eps) * gamma + beta).astype(jnp.bfloat16)

    # One wide, lane-dense MXU matmul for Q, K and V together (Q pre-scaled).
    qkv = jnp.dot(xn, wqkv_ref[...], preferred_element_type=jnp.float32)

    q_ref[0] = qkv[:, :inner].astype(jnp.bfloat16)
    k_ref[0] = qkv[:, inner:2 * inner].astype(jnp.bfloat16)
    v_ref[0] = qkv[:, 2 * inner:].astype(jnp.bfloat16)


# --------------------------------------------------------------------------
# Kernel 2: flash attention + output projection + residual add
# --------------------------------------------------------------------------
def _flash_attn_kernel(q_ref, k_ref, v_ref, x_ref, wout_ref, bout_ref,
                       o_ref,
                       m_sc, l_sc, acc_sc,
                       *, heads, dim_head, seq_len, mask_kv):
    ki = pl.program_id(2)
    nkv = pl.num_programs(2)

    @pl.when(ki == 0)
    def _init():
        m_sc[...] = jnp.full(m_sc.shape, _NEG_INF, dtype=jnp.float32)
        l_sc[...] = jnp.zeros(l_sc.shape, jnp.float32)
        acc_sc[...] = jnp.zeros(acc_sc.shape, jnp.float32)

    q = q_ref[0]                                           # (tq, inner) bf16
    k = k_ref[0]                                           # (tk, inner) bf16
    v = v_ref[0]                                           # (tk, inner) bf16
    tq, tk = q.shape[0], k.shape[0]

    if mask_kv:
        col = ki * tk + jax.lax.broadcasted_iota(jnp.int32, (tq, tk), 1)
        valid = col < seq_len

    # ---- online softmax per head, accumulated into lane-dense slabs --------
    for h in range(heads):
        sl = slice(h * dim_head, (h + 1) * dim_head)
        # contract the last dims -> MXU handles the "transpose", no k.T relayout
        s = jax.lax.dot_general(q[:, sl], k[:, sl],
                                (((1,), (1,)), ((), ())),
                                preferred_element_type=jnp.float32)  # (tq, tk)
        if mask_kv:
            s = jnp.where(valid, s, _NEG_INF)
        m_prev = m_sc[:, h:h + 1]                                    # (tq, 1)
        m_new = jnp.maximum(m_prev, jnp.max(s, axis=-1, keepdims=True))
        alpha = jnp.exp(m_prev - m_new)
        p = jnp.exp(s - m_new)                                       # f32 (safe on v5e)
        l_sc[:, h:h + 1] = alpha * l_sc[:, h:h + 1] + jnp.sum(p, axis=-1,
                                                              keepdims=True)
        acc_sc[:, sl] = alpha * acc_sc[:, sl] + jnp.dot(
            p.astype(jnp.bfloat16), v[:, sl], preferred_element_type=jnp.float32)
        m_sc[:, h:h + 1] = m_new

    # ---- finalize: normalize slab in place, lane-dense projection, residual -
    @pl.when(ki == nkv - 1)
    def _finish():
        for h in range(heads):
            sl = slice(h * dim_head, (h + 1) * dim_head)
            inv_l = pl.reciprocal(l_sc[:, h:h + 1], approx=True)  # EUP slot, ~free
            acc_sc[:, sl] = acc_sc[:, sl] * inv_l
        ctx = acc_sc[...].astype(jnp.bfloat16)                    # (tq, inner)
        y = jnp.dot(ctx, wout_ref[...], preferred_element_type=jnp.float32)
        # TODO(synk): Dropout in Attention.to_out is identity at inference; omitted.
        y = y + bout_ref[0].astype(jnp.float32) + x_ref[0].astype(jnp.float32)
        o_ref[0] = y.astype(o_ref.dtype)


# --------------------------------------------------------------------------
# Wrapper
# --------------------------------------------------------------------------
def _round_up(n, m):
    return ((n + m - 1) // m) * m


def _vmem_limit(nbytes):
    # Leave headroom for compiler scratch; at small shapes fall back to 32 MiB
    # (safe on every generation; v7x users should keep tiles so this stays
    # comfortably under its 64 MiB physical VMEM).
    return max(32 * 1024 * 1024, int(nbytes) + 16 * 1024 * 1024)


def prenorm_attention(x, gamma, beta, w_qkv, w_out, b_out, *, heads, dim_head,
                      eps=1e-5, q_tile=256, kv_tile=256):
    """PreNormattention forward: Attention(LayerNorm(x)) + x.  x: (B, N, D)."""
    B, N, D = x.shape
    inner = heads * dim_head
    assert w_qkv.shape == (D, 3 * inner)
    assert w_out.shape == (inner, D)

    # Tile selection: clamp to the (8-rounded) sequence length, then pad N to a
    # common multiple so awkward N never degenerates to tiny tiles.
    tq = _round_up(min(q_tile, _round_up(N, 8)), 8)
    tk = _round_up(min(kv_tile, _round_up(N, 8)), 8)
    n_pad = _round_up(N, math.lcm(tq, tk))
    nq, nkv = n_pad // tq, n_pad // tk
    mask_kv = n_pad != N

    x_p = jnp.pad(x, ((0, 0), (0, n_pad - N), (0, 0))) if mask_kv else x

    # Host-side weight prep (one-off XLA ops): fold the q scale into the qkv
    # weight, cast weights to bf16 (halves weight DMA + resident VMEM; matmuls
    # still accumulate in f32).
    scale = float(dim_head) ** -0.5
    w_qkv_s = jnp.concatenate(
        [w_qkv[:, :inner] * scale, w_qkv[:, inner:]], axis=1).astype(jnp.bfloat16)
    w_o = w_out.astype(jnp.bfloat16)
    gamma2 = gamma.reshape(1, D).astype(jnp.float32)
    beta2 = beta.reshape(1, D).astype(jnp.float32)
    bout2 = b_out.reshape(1, D).astype(jnp.float32)

    const_spec = lambda shape: pl.BlockSpec(shape, lambda *_: tuple(0 for _ in shape),
                                            pipeline_mode=pl.Buffered(1))

    # ---- Kernel 1: LayerNorm + QKV projection, once per row ----------------
    vmem1 = _vmem_limit(
        2 * tq * D * x.dtype.itemsize          # x tiles (double-buffered)
        + 2 * 3 * tq * inner * 2               # q/k/v output tiles
        + D * 3 * inner * 2                    # qkv weight (single-buffered)
        + 2 * tq * 3 * inner * 4)              # f32 matmul result temp
    qkv_kernel = functools.partial(_ln_qkv_kernel, inner=inner, eps=eps)
    q_p, k_p, v_p = pl.pallas_call(
        qkv_kernel,
        out_shape=(jax.ShapeDtypeStruct((B, n_pad, inner), jnp.bfloat16),
                   jax.ShapeDtypeStruct((B, n_pad, inner), jnp.bfloat16),
                   jax.ShapeDtypeStruct((B, n_pad, inner), jnp.bfloat16)),
        grid_spec=pltpu.PrefetchScalarGridSpec(
            num_scalar_prefetch=0,
            grid=(B, nq),
            in_specs=[
                pl.BlockSpec((1, tq, D), lambda b, r: (b, r, 0)),      # x rows
                const_spec((1, D)),                                    # gamma
                const_spec((1, D)),                                    # beta
                const_spec((D, 3 * inner)),                            # w_qkv
            ],
            out_specs=[
                pl.BlockSpec((1, tq, inner), lambda b, r: (b, r, 0)),  # q
                pl.BlockSpec((1, tq, inner), lambda b, r: (b, r, 0)),  # k
                pl.BlockSpec((1, tq, inner), lambda b, r: (b, r, 0)),  # v
            ],
        ),
        compiler_params=pltpu.CompilerParams(
            dimension_semantics=("parallel", "parallel"),
            vmem_limit_bytes=vmem1,
        ),
    )(x_p, gamma2, beta2, w_qkv_s)

    # ---- Kernel 2: flash attention + output projection + residual ----------
    vmem2 = _vmem_limit(
        2 * tq * inner * 2                     # q tiles
        + 2 * 2 * tk * inner * 2               # k + v tiles
        + 2 * tq * D * x.dtype.itemsize        # residual x tiles
        + 2 * tq * D * x.dtype.itemsize        # output tiles
        + inner * D * 2                        # w_out (single-buffered)
        + tq * inner * 4                       # acc slab
        + 2 * tq * 128 * 4                     # m / l (lane-padded)
        + tq * max(tk, 128) * 4 * 2)           # score/exp temps
    flash_kernel = functools.partial(_flash_attn_kernel, heads=heads,
                                     dim_head=dim_head, seq_len=N,
                                     mask_kv=mask_kv)
    # Note (v7x): B * nq should be >= 2 (ideally even) so the two "parallel"
    # axes balance across the two TensorCores.
    out = pl.pallas_call(
        flash_kernel,
        out_shape=jax.ShapeDtypeStruct((B, n_pad, D), x.dtype),
        grid_spec=pltpu.PrefetchScalarGridSpec(
            num_scalar_prefetch=0,
            grid=(B, nq, nkv),
            in_specs=[
                pl.BlockSpec((1, tq, inner), lambda b, qi, ki: (b, qi, 0)),  # q
                pl.BlockSpec((1, tk, inner), lambda b, qi, ki: (b, ki, 0)),  # k
                pl.BlockSpec((1, tk, inner), lambda b, qi, ki: (b, ki, 0)),  # v
                pl.BlockSpec((1, tq, D), lambda b, qi, ki: (b, qi, 0)),      # x (residual)
                const_spec((inner, D)),                                      # w_out
                const_spec((1, D)),                                          # b_out
            ],
            out_specs=pl.BlockSpec((1, tq, D), lambda b, qi, ki: (b, qi, 0)),
            scratch_shapes=[
                pltpu.VMEM((tq, heads), jnp.float32),   # running max (lane-dense)
                pltpu.VMEM((tq, heads), jnp.float32),   # running sum (lane-dense)
                pltpu.VMEM((tq, inner), jnp.float32),   # context accumulator slab
            ],
        ),
        compiler_params=pltpu.CompilerParams(
            dimension_semantics=("parallel", "parallel", "arbitrary"),
            vmem_limit_bytes=vmem2,
        ),
    )(q_p, k_p, v_p, x_p, w_o, bout2)

    if mask_kv:
        out = out[:, :N, :]
    return out


# --------------------------------------------------------------------------
# Pure-JAX reference + tests
# --------------------------------------------------------------------------
def _reference(x, gamma, beta, w_qkv, w_out, b_out, *, heads, dim_head, eps=1e-5):
    mean = jnp.mean(x, axis=-1, keepdims=True)
    var = jnp.mean((x - mean) ** 2, axis=-1, keepdims=True)
    xn = (x - mean) / jnp.sqrt(var + eps) * gamma + beta
    B, N, D = x.shape
    inner = heads * dim_head
    qkv = xn @ w_qkv
    q, k, v = jnp.split(qkv, 3, axis=-1)

    def to_heads(t):
        return t.reshape(B, N, heads, dim_head).transpose(0, 2, 1, 3)

    q, k, v = to_heads(q), to_heads(k), to_heads(v)
    dots = jnp.einsum('bhnd,bhmd->bhnm', q, k) * (dim_head ** -0.5)
    attn = jax.nn.softmax(dots, axis=-1)
    out = jnp.einsum('bhnm,bhmd->bhnd', attn, v)
    out = out.transpose(0, 2, 1, 3).reshape(B, N, inner)
    return out @ w_out + b_out + x


def _run_case(key, B, N, D, heads, dim_head, **tile_kw):
    inner = heads * dim_head
    kx, kg, kb, kq, kw, kbo = jax.random.split(key, 6)
    x = jax.random.normal(kx, (B, N, D), dtype=jnp.float32)
    gamma = 1.0 + 0.05 * jax.random.normal(kg, (D,), dtype=jnp.float32)
    beta = 0.05 * jax.random.normal(kb, (D,), dtype=jnp.float32)
    w_qkv = 0.1 * jax.random.normal(kq, (D, 3 * inner), dtype=jnp.float32)
    w_out = 0.1 * jax.random.normal(kw, (inner, D), dtype=jnp.float32)
    b_out = 0.05 * jax.random.normal(kbo, (D,), dtype=jnp.float32)

    y = prenorm_attention(x, gamma, beta, w_qkv, w_out, b_out,
                          heads=heads, dim_head=dim_head, **tile_kw)
    y = jax.block_until_ready(y)
    y_ref = _reference(x, gamma, beta, w_qkv, w_out, b_out,
                       heads=heads, dim_head=dim_head)
    err = float(jnp.max(jnp.abs(y - y_ref)))
    assert y.shape == (B, N, D)
    # bf16 MXU feeds -> slightly looser tolerance than a pure-f32 comparison.
    assert jnp.allclose(y, y_ref, atol=5e-2, rtol=5e-2), f"max err {err}"
    return err


if __name__ == "__main__":
    key = jax.random.PRNGKey(0)
    k1, k2, k3 = jax.random.split(key, 3)
    # Single q/kv block (N fits one tile).
    _run_case(k1, B=2, N=8, D=32, heads=4, dim_head=8)
    # Multi-block path: 2 query blocks x 2 kv blocks (exercises the online
    # softmax accumulation / init / finalize across the "arbitrary" kv axis).
    _run_case(k2, B=2, N=16, D=32, heads=4, dim_head=8, q_tile=8, kv_tile=8)
    # Awkward N: exercises the padding + masked-KV path (N=12 padded to 16).
    _run_case(k3, B=2, N=12, D=32, heads=4, dim_head=8, q_tile=8, kv_tile=8)
    print("KERNEL_OK")
</pallas_src>

<mosaic_0001>
module attributes {stable_mosaic.version = 11 : i64} {
  func.func @_ln_qkv_kernel(%arg0: i32, %arg1: i32, %arg2: memref<1x8x32xf32, #tpu.memory_space<vmem>>, %arg3: memref<1x32xf32, #tpu.memory_space<vmem>>, %arg4: memref<1x32xf32, #tpu.memory_space<vmem>>, %arg5: memref<32x96xbf16, #tpu.memory_space<vmem>>, %arg6: memref<1x8x32xbf16, #tpu.memory_space<vmem>>, %arg7: memref<1x8x32xbf16, #tpu.memory_space<vmem>>, %arg8: memref<1x8x32xbf16, #tpu.memory_space<vmem>>) attributes {dimension_semantics = [#tpu.dimension_semantics<parallel>, #tpu.dimension_semantics<parallel>], iteration_bounds = array<i64: 2, 1>, scalar_prefetch = 0 : i64, scratch_operands = 0 : i64, tpu.core_type = #tpu.core_type<tc>, window_params = [{transform_indices = @transform_0, window_bounds = array<i64: 1, 8, 32>}, {pipeline_mode = #tpu.pipeline_mode<synchronous>, transform_indices = @transform_1, window_bounds = array<i64: 1, 32>}, {pipeline_mode = #tpu.pipeline_mode<synchronous>, transform_indices = @transform_2, window_bounds = array<i64: 1, 32>}, {pipeline_mode = #tpu.pipeline_mode<synchronous>, transform_indices = @transform_3, window_bounds = array<i64: 32, 96>}, {transform_indices = @transform_4, window_bounds = array<i64: 1, 8, 32>}, {transform_indices = @transform_5, window_bounds = array<i64: 1, 8, 32>}, {transform_indices = @transform_6, window_bounds = array<i64: 1, 8, 32>}]} {
    %c0 = arith.constant 0 : index
    %c0_0 = arith.constant 0 : index
    %c0_1 = arith.constant 0 : index
    %0 = vector.load %arg2[%c0, %c0_0, %c0_1] : memref<1x8x32xf32, #tpu.memory_space<vmem>>, vector<1x8x32xf32>
    %1 = vector.shape_cast %0 : vector<1x8x32xf32> to vector<8x32xf32>
    %c0_2 = arith.constant 0 : index
    %c0_3 = arith.constant 0 : index
    %2 = vector.load %arg3[%c0_2, %c0_3] : memref<1x32xf32, #tpu.memory_space<vmem>>, vector<1x32xf32>
    %3 = vector.shape_cast %2 : vector<1x32xf32> to vector<32xf32>
    %c0_4 = arith.constant 0 : index
    %c0_5 = arith.constant 0 : index
    %4 = vector.load %arg4[%c0_4, %c0_5] : memref<1x32xf32, #tpu.memory_space<vmem>>, vector<1x32xf32>
    %5 = vector.shape_cast %4 : vector<1x32xf32> to vector<32xf32>
    %cst = arith.constant dense<0.000000e+00> : vector<8xf32>
    %6 = vector.multi_reduction <add>, %1, %cst [1] : vector<8x32xf32> to vector<8xf32>
    %7 = vector.shape_cast %6 : vector<8xf32> to vector<8x1xf32>
    %cst_6 = arith.constant 3.200000e+01 : f32
    %8 = vector.broadcast %cst_6 : f32 to vector<8x1xf32>
    %9 = arith.divf %7, %8 : vector<8x1xf32>
    %10 = vector.broadcast %9 : vector<8x1xf32> to vector<8x32xf32>
    %11 = arith.subf %1, %10 : vector<8x32xf32>
    %12 = arith.mulf %11, %11 : vector<8x32xf32>
    %cst_7 = arith.constant dense<0.000000e+00> : vector<8xf32>
    %13 = vector.multi_reduction <add>, %12, %cst_7 [1] : vector<8x32xf32> to vector<8xf32>
    %14 = vector.shape_cast %13 : vector<8xf32> to vector<8x1xf32>
    %cst_8 = arith.constant 3.200000e+01 : f32
    %15 = vector.broadcast %cst_8 : f32 to vector<8x1xf32>
    %16 = arith.divf %14, %15 : vector<8x1xf32>
    %cst_9 = arith.constant 9.99999974E-6 : f32
    %17 = vector.broadcast %cst_9 : f32 to vector<8x1xf32>
    %18 = arith.addf %16, %17 : vector<8x1xf32>
    %19 = math.rsqrt %18 : vector<8x1xf32>
    %20 = vector.broadcast %19 : vector<8x1xf32> to vector<8x32xf32>
    %21 = arith.mulf %11, %20 : vector<8x32xf32>
    %22 = vector.shape_cast %3 : vector<32xf32> to vector<1x32xf32>
    %23 = vector.broadcast %22 : vector<1x32xf32> to vector<8x32xf32>
    %24 = arith.mulf %21, %23 : vector<8x32xf32>
    %25 = vector.shape_cast %5 : vector<32xf32> to vector<1x32xf32>
    %26 = vector.broadcast %25 : vector<1x32xf32> to vector<8x32xf32>
    %27 = arith.addf %24, %26 : vector<8x32xf32>
    %28 = arith.truncf %27 : vector<8x32xf32> to vector<8x32xbf16>
    %c0_10 = arith.constant 0 : index
    %c0_11 = arith.constant 0 : index
    %29 = vector.load %arg5[%c0_10, %c0_11] : memref<32x96xbf16, #tpu.memory_space<vmem>>, vector<32x96xbf16>
    %cst_12 = arith.constant dense<0.000000e+00> : vector<8x96xf32>
    %30 = tpu.matmul %28, %29, %cst_12 {dimension_numbers = #tpu.dot_dimension_numbers<[1], [0], [0], [1], [0, 0, 1, 1], [], []>} : vector<8x32xbf16>, vector<32x96xbf16>, vector<8x96xf32> -> vector<8x96xf32>
    %31 = vector.extract_strided_slice %30 {offsets = [0, 0], sizes = [8, 32], strides = [1, 1]} : vector<8x96xf32> to vector<8x32xf32>
    %32 = arith.truncf %31 : vector<8x32xf32> to vector<8x32xbf16>
    %c0_13 = arith.constant 0 : index
    %c0_14 = arith.constant 0 : index
    %c0_15 = arith.constant 0 : index
    %33 = vector.load %arg6[%c0_13, %c0_14, %c0_15] : memref<1x8x32xbf16, #tpu.memory_space<vmem>>, vector<1x8x32xbf16>
    %34 = vector.shape_cast %33 : vector<1x8x32xbf16> to vector<8x32xbf16>
    %35 = vector.shape_cast %32 : vector<8x32xbf16> to vector<1x8x32xbf16>
    tpu.vector_store %arg6[%c0_13, %c0_14, %c0_15], %35 {strides = array<i32>} : memref<1x8x32xbf16, #tpu.memory_space<vmem>>, vector<1x8x32xbf16>,
    %36 = vector.extract_strided_slice %30 {offsets = [0, 32], sizes = [8, 32], strides = [1, 1]} : vector<8x96xf32> to vector<8x32xf32>
    %37 = arith.truncf %36 : vector<8x32xf32> to vector<8x32xbf16>
    %c0_16 = arith.constant 0 : index
    %c0_17 = arith.constant 0 : index
    %c0_18 = arith.constant 0 : index
    %38 = vector.load %arg7[%c0_16, %c0_17, %c0_18] : memref<1x8x32xbf16, #tpu.memory_space<vmem>>, vector<1x8x32xbf16>
    %39 = vector.shape_cast %38 : vector<1x8x32xbf16> to vector<8x32xbf16>
    %40 = vector.shape_cast %37 : vector<8x32xbf16> to vector<1x8x32xbf16>
    tpu.vector_store %arg7[%c0_16, %c0_17, %c0_18], %40 {strides = array<i32>} : memref<1x8x32xbf16, #tpu.memory_space<vmem>>, vector<1x8x32xbf16>,
    %41 = vector.extract_strided_slice %30 {offsets = [0, 64], sizes = [8, 32], strides = [1, 1]} : vector<8x96xf32> to vector<8x32xf32>
    %42 = arith.truncf %41 : vector<8x32xf32> to vector<8x32xbf16>
    %c0_19 = arith.constant 0 : index
    %c0_20 = arith.constant 0 : index
    %c0_21 = arith.constant 0 : index
    %43 = vector.load %arg8[%c0_19, %c0_20, %c0_21] : memref<1x8x32xbf16, #tpu.memory_space<vmem>>, vector<1x8x32xbf16>
    %44 = vector.shape_cast %43 : vector<1x8x32xbf16> to vector<8x32xbf16>
    %45 = vector.shape_cast %42 : vector<8x32xbf16> to vector<1x8x32xbf16>
    tpu.vector_store %arg8[%c0_19, %c0_20, %c0_21], %45 {strides = array<i32>} : memref<1x8x32xbf16, #tpu.memory_space<vmem>>, vector<1x8x32xbf16>,
    return
  }
  func.func @transform_0(%arg0: i32, %arg1: i32) -> (i32, i32, i32) {
    %c0_i32 = arith.constant 0 : i32
    %c0_i32_0 = arith.constant 0 : i32
    return %arg0, %arg1, %c0_i32 : i32, i32, i32
  }
  func.func @transform_1(%arg0: i32, %arg1: i32) -> (i32, i32) {
    %c0_i32 = arith.constant 0 : i32
    %c0_i32_0 = arith.constant 0 : i32
    %c0_i32_1 = arith.constant 0 : i32
    return %c0_i32, %c0_i32_0 : i32, i32
  }
  func.func @transform_2(%arg0: i32, %arg1: i32) -> (i32, i32) {
    %c0_i32 = arith.constant 0 : i32
    %c0_i32_0 = arith.constant 0 : i32
    %c0_i32_1 = arith.constant 0 : i32
    return %c0_i32, %c0_i32_0 : i32, i32
  }
  func.func @transform_3(%arg0: i32, %arg1: i32) -> (i32, i32) {
    %c0_i32 = arith.constant 0 : i32
    %c0_i32_0 = arith.constant 0 : i32
    %c0_i32_1 = arith.constant 0 : i32
    return %c0_i32, %c0_i32_0 : i32, i32
  }
  func.func @transform_4(%arg0: i32, %arg1: i32) -> (i32, i32, i32) {
    %c0_i32 = arith.constant 0 : i32
    %c0_i32_0 = arith.constant 0 : i32
    return %arg0, %arg1, %c0_i32 : i32, i32, i32
  }
  func.func @transform_5(%arg0: i32, %arg1: i32) -> (i32, i32, i32) {
    %c0_i32 = arith.constant 0 : i32
    %c0_i32_0 = arith.constant 0 : i32
    return %arg0, %arg1, %c0_i32 : i32, i32, i32
  }
  func.func @transform_6(%arg0: i32, %arg1: i32) -> (i32, i32, i32) {
    %c0_i32 = arith.constant 0 : i32
    %c0_i32_0 = arith.constant 0 : i32
    return %arg0, %arg1, %c0_i32 : i32, i32, i32
  }
}

</mosaic_0001>

<llo_original>
// kernel: tpu_custom_call.1
$region0: #{tpu_custom_call.1}
  #allocation0 [shape = 'u32[]', space=smem, size = 0x4, offset = 0x4, fixed_abs, tag = 'smem constant byte address 0x4 - core index']
  #allocation1 [shape = 'u32[72,128]{1,0:T(1,128)}', space=vmem, size = 0x9000, scoped, tag = 'internal scratch']
  %s0 = inlined_call_operand.hbm [shape: f32[2,8,32], index: 0, kind: input, shape index: {}]
  %s1 = inlined_call_operand.hbm [shape: f32[1,32], index: 1, kind: input, shape index: {}]
  %s2 = inlined_call_operand.vmem [shape: f32[1,32], index: 2, kind: input, shape index: {}]
  %s3 = inlined_call_operand.hbm [shape: bf16[32,96], index: 3, kind: input, shape index: {}]
  %s4 = inlined_call_operand.hbm [shape: bf16[2,8,32], index: 4, kind: output, shape index: {0}]
  %s5 = inlined_call_operand.hbm [shape: bf16[2,8,32], index: 5, kind: output, shape index: {1}]
  %s6 = inlined_call_operand.hbm [shape: bf16[2,8,32], index: 6, kind: output, shape index: {2}]
  %7 = xla_tuple %s4, %s5, %s6
  %s8 = sld [smem:[#allocation0]]
  $region77: #{tpu_custom_call.1} parent=0
    _
  %s10 = ssub.s32 1, %s8
  %s11 = scalar_select 0, %s10, %s8
  $region1: #{tpu_custom_call.1} parent=0
    #allocation2 [shape = 'u8[8192]{0}', space=vmem, size = 0x2000, scoped, tag = 'input window, operand 0']
    #allocation3 [shape = 's32[2]{0}', space=sflag, size = 0x8, scoped, tag = 'scoped memory for tpu_custom_call.1']
    #allocation4 [shape = 's32[2]{0}', space=sflag, size = 0x8, scoped, tag = 'scoped memory for tpu_custom_call.1']
    #allocation5 [shape = 'u8[512]{0}', space=vmem, size = 0x400, scoped, tag = 'input window, operand 1, single buffered']
    #allocation6 [shape = 's32[1]{0}', space=sflag, size = 0x4, scoped, tag = 'scoped memory for tpu_custom_call.1']
    #allocation7 [shape = 'u8[8192]{0}', space=vmem, size = 0x2000, scoped, tag = 'input window, operand 3, single buffered']
    #allocation8 [shape = 'u8[4096]{0}', space=vmem, size = 0x1000, scoped, tag = 'output window, operand 0']
    #allocation9 [shape = 'u8[4096]{0}', space=vmem, size = 0x1000, scoped, tag = 'output window, operand 1']
    #allocation10 [shape = 's32[2]{0}', space=sflag, size = 0x8, scoped, tag = 'scoped memory for tpu_custom_call.1']
    #allocation11 [shape = 'u8[4096]{0}', space=vmem, size = 0x1000, scoped, tag = 'output window, operand 2']
    %12 = vsyncpa [#allocation3], 0
    %s13 = scalar_lea.sflag [#allocation3], 1
    %14 = vsyncpa %s13, 0
    %15 = vsyncpa [#allocation6], 0
    %16 = vsyncpa [#allocation4], 0
    %s17 = scalar_lea.sflag [#allocation4], 1
    %18 = vsyncpa %s17, 0
    %19 = vsyncpa [#allocation10], 0
    %s20 = scalar_lea.sflag [#allocation10], 1
    %21 = vsyncpa %s20, 0
    loop: start=0, step=1, limit=4
    $region2: #{tpu_custom_call.1} parent=1 // loop_pre_header
      _
    $region3: #{tpu_custom_call.1} parent=1 // loop_header
      %s23 = sphi 0, %s27
      %p24 = scmp.ge.s32.totalorder %s23, 4
      %s30 = sphi 0, %s42
      %s31 = sphi 0, %s38
      %s32 = sphi 0, %s30
      %s33 = sphi 0, %s31
      %s34 = sphi 0, %s32
      %s35 = sphi 0, %s33
      %s47 = sphi 0, %s49
      %s50 = sphi 0, %s47
      %s51 = sphi 0, %s50
      %s67 = sphi 0, %s51
      %s71 = sphi 0, %s71
      %s73 = sphi 0, %s71
      %s74 = sphi 0, %s73
      %s88 = sphi 0, %s74
      %s92 = sphi 0, %s92
      %s94 = sphi 0, %s92
      %s95 = sphi 0, %s94
      %s109 = sphi 0, %s95
      %s113 = sphi 0, %s113
      %s115 = sphi 0, %s113
      %s116 = sphi 0, %s115
      %s130 = sphi 0, %s116
      %s138 = sphi 0, %s140
      %s141 = sphi 0, %s138
      %s142 = sphi 0, %s141
      %s158 = sphi 0, %s142
      %s166 = sphi 0, %s168
      %s169 = sphi 0, %s166
      %s170 = sphi 0, %s169
      %s186 = sphi 0, %s170
      %s194 = sphi 0, %s196
      %s197 = sphi 0, %s194
      %s198 = sphi 0, %s197
      %s214 = sphi 0, %s198
    $region4: #{tpu_custom_call.1} parent=1 // loop_header_branch
      %26 = sbr.rel (%p24) target = $region8
    $region5: #{tpu_custom_call.1} parent=1 // loop_body
      %s28 = ssub.s32 %s23, 1
      %s29 = ssub.s32 %s23, 2
      %s36 = sadd.s32 1, %s31
      %p37 = scmp.ge.s32.totalorder %s36, 1
      %s38 = scalar_select %p37, 0, %s36
      %s39 = sadd.s32 1, %s30
      %s40 = scalar_select %p37, %s39, %s30
      %p41 = scmp.ge.s32.totalorder %s40, 2
      %s42 = scalar_select %p41, 0, %s40
      %s43 = ssub.s32 %s30, %s42
      %s44 = ssub.s32 %s31, %s38
      %s45 = sor.u32 %s43, %s44
      %p46 = scmp.eq.s32.totalorder %s45, 0
      %s48 = sadd.s32 %s47, 1
      %s49 = scalar_select %p46, %s47, %s48
      %p52 = pneg %p46
      %p53 = scmp.eq.s32.totalorder %s23, 1
      %p54 = por %p52, %p53
      %p55 = scmp.ne.s32.totalorder %s47, %s50
      %p56 = scmp.eq.s32.totalorder %s23, 0
      %p57 = por %p55, %p56
      %p58 = scmp.ne.s32.totalorder %s47, %s50
      %p59 = scmp.eq.s32.totalorder %s28, 1
      %p60 = por %p58, %p59
      %p61 = scmp.ne.s32.totalorder %s50, %s51
      %p62 = scmp.eq.s32.totalorder %s28, 0
      %p63 = por %p61, %p62
      %p64 = scmp.ne.s32.totalorder %s50, %s51
      %p65 = scmp.eq.s32.totalorder %s29, 1
      %p66 = por %p64, %p65
      %p68 = scmp.ne.s32.totalorder %s51, %s67
      %p69 = scmp.eq.s32.totalorder %s29, 0
      %p70 = por %p68, %p69
      %s72 = sadd.s32 %s71, 1
      %p75 = scmp.eq.s32.totalorder %s23, 1
      %p76 = scmp.ne.s32.totalorder %s71, %s73
      %p77 = scmp.eq.s32.totalorder %s23, 0
      %p78 = por %p76, %p77
      %p79 = scmp.ne.s32.totalorder %s71, %s73
      %p80 = scmp.eq.s32.totalorder %s28, 1
      %p81 = por %p79, %p80
      %p82 = scmp.ne.s32.totalorder %s73, %s74
      %p83 = scmp.eq.s32.totalorder %s28, 0
      %p84 = por %p82, %p83
      %p85 = scmp.ne.s32.totalorder %s73, %s74
      %p86 = scmp.eq.s32.totalorder %s29, 1
      %p87 = por %p85, %p86
      %p89 = scmp.ne.s32.totalorder %s74, %s88
      %p90 = scmp.eq.s32.totalorder %s29, 0
      %p91 = por %p89, %p90
      %s93 = sadd.s32 %s92, 1
      %p96 = scmp.eq.s32.totalorder %s23, 1
      %p97 = scmp.ne.s32.totalorder %s92, %s94
      %p98 = scmp.eq.s32.totalorder %s23, 0
      %p99 = por %p97, %p98
      %p100 = scmp.ne.s32.totalorder %s92, %s94
      %p101 = scmp.eq.s32.totalorder %s28, 1
      %p102 = por %p100, %p101
      %p103 = scmp.ne.s32.totalorder %s94, %s95
      %p104 = scmp.eq.s32.totalorder %s28, 0
      %p105 = por %p103, %p104
      %p106 = scmp.ne.s32.totalorder %s94, %s95
      %p107 = scmp.eq.s32.totalorder %s29, 1
      %p108 = por %p106, %p107
      %p110 = scmp.ne.s32.totalorder %s95, %s109
      %p111 = scmp.eq.s32.totalorder %s29, 0
      %p112 = por %p110, %p111
      %s114 = sadd.s32 %s113, 1
      %p117 = scmp.eq.s32.totalorder %s23, 1
      %p118 = scmp.ne.s32.totalorder %s113, %s115
      %p119 = scmp.eq.s32.totalorder %s23, 0
      %p120 = por %p118, %p119
      %p121 = scmp.ne.s32.totalorder %s113, %s115
      %p122 = scmp.eq.s32.totalorder %s28, 1
      %p123 = por %p121, %p122
      %p124 = scmp.ne.s32.totalorder %s115, %s116
      %p125 = scmp.eq.s32.totalorder %s28, 0
      %p126 = por %p124, %p125
      %p127 = scmp.ne.s32.totalorder %s115, %s116
      %p128 = scmp.eq.s32.totalorder %s29, 1
      %p129 = por %p127, %p128
      %p131 = scmp.ne.s32.totalorder %s116, %s130
      %p132 = scmp.eq.s32.totalorder %s29, 0
      %p133 = por %p131, %p132
      %s134 = ssub.s32 %s30, %s42
      %s135 = ssub.s32 %s31, %s38
      %s136 = sor.u32 %s134, %s135
      %p137 = scmp.eq.s32.totalorder %s136, 0
      %s139 = sadd.s32 %s138, 1
      %s140 = scalar_select %p137, %s138, %s139
      %p143 = pneg %p137
      %p144 = scmp.eq.s32.totalorder %s23, 1
      %p145 = por %p143, %p144
      %p146 = scmp.ne.s32.totalorder %s138, %s141
      %p147 = scmp.eq.s32.totalorder %s23, 0
      %p148 = por %p146, %p147
      %p149 = scmp.ne.s32.totalorder %s138, %s141
      %p150 = scmp.eq.s32.totalorder %s28, 1
      %p151 = por %p149, %p150
      %p152 = scmp.ne.s32.totalorder %s141, %s142
      %p153 = scmp.eq.s32.totalorder %s28, 0
      %p154 = por %p152, %p153
      %p155 = scmp.ne.s32.totalorder %s141, %s142
      %p156 = scmp.eq.s32.totalorder %s29, 1
      %p157 = por %p155, %p156
      %p159 = scmp.ne.s32.totalorder %s142, %s158
      %p160 = scmp.eq.s32.totalorder %s29, 0
      %p161 = por %p159, %p160
      %s162 = ssub.s32 %s30, %s42
      %s163 = ssub.s32 %s31, %s38
      %s164 = sor.u32 %s162, %s163
      %p165 = scmp.eq.s32.totalorder %s164, 0
      %s167 = sadd.s32 %s166, 1
      %s168 = scalar_select %p165, %s166, %s167
      %p171 = pneg %p165
      %p172 = scmp.eq.s32.totalorder %s23, 1
      %p173 = por %p171, %p172
      %p174 = scmp.ne.s32.totalorder %s166, %s169
      %p175 = scmp.eq.s32.totalorder %s23, 0
      %p176 = por %p174, %p175
      %p177 = scmp.ne.s32.totalorder %s166, %s169
      %p178 = scmp.eq.s32.totalorder %s28, 1
      %p179 = por %p177, %p178
      %p180 = scmp.ne.s32.totalorder %s169, %s170
      %p181 = scmp.eq.s32.totalorder %s28, 0
      %p182 = por %p180, %p181
      %p183 = scmp.ne.s32.totalorder %s169, %s170
      %p184 = scmp.eq.s32.totalorder %s29, 1
      %p185 = por %p183, %p184
      %p187 = scmp.ne.s32.totalorder %s170, %s186
      %p188 = scmp.eq.s32.totalorder %s29, 0
      %p189 = por %p187, %p188
      %s190 = ssub.s32 %s30, %s42
      %s191 = ssub.s32 %s31, %s38
      %s192 = sor.u32 %s190, %s191
      %p193 = scmp.eq.s32.totalorder %s192, 0
      %s195 = sadd.s32 %s194, 1
      %s196 = scalar_select %p193, %s194, %s195
      %p199 = pneg %p193
      %p200 = scmp.eq.s32.totalorder %s23, 1
      %p201 = por %p199, %p200
      %p202 = scmp.ne.s32.totalorder %s194, %s197
      %p203 = scmp.eq.s32.totalorder %s23, 0
      %p204 = por %p202, %p203
      %p205 = scmp.ne.s32.totalorder %s194, %s197
      %p206 = scmp.eq.s32.totalorder %s28, 1
      %p207 = por %p205, %p206
      %p208 = scmp.ne.s32.totalorder %s197, %s198
      %p209 = scmp.eq.s32.totalorder %s28, 0
      %p210 = por %p208, %p209
      %p211 = scmp.ne.s32.totalorder %s197, %s198
      %p212 = scmp.eq.s32.totalorder %s29, 1
      %p213 = por %p211, %p212
      %p215 = scmp.ne.s32.totalorder %s198, %s214
      %p216 = scmp.eq.s32.totalorder %s29, 0
      %p217 = por %p215, %p216
      %p218 = scmp.le.s32.totalorder 1, %s23
      %p219 = scmp.lt.s32.totalorder %s23, 3
      %p220 = pnand %p218, %p219
      %p221 = pneg %p220
      // Predicated region
      $region9: #{tpu_custom_call.1} parent=5 // pred_check
        _
      $region10: #{tpu_custom_call.1} parent=5 // pred_check_branch
        %223 = sbr.rel (%p220) target = $region12
      $region11: #{tpu_custom_call.1} parent=5 // pred_region
        %s224 = ssub.s32 %s23, 1
        // Predicated region
        $region13: #{tpu_custom_call.1} parent=11 // pred_check
          %p225 = pneg %p84
        $region14: #{tpu_custom_call.1} parent=11 // pred_check_branch
          %227 = sbr.rel (%p225) target = $region16
        $region15: #{tpu_custom_call.1} parent=11 // pred_region
          %229 = vsyncadd [#allocation6], 0
          %s231 = sshll.u32 %s1, 4
          %s232 = int_to_ptr.hbm [resolvable:$true] %s231
          %s233 = sshll.u32 [#allocation5], 4
          %s234 = int_to_ptr.vmem [resolvable:$true] %s233
          %236 = dma.hbm_to_vmem [thread:$0]  %s232, 16, %s234, [#allocation6]
        $region16: #{tpu_custom_call.1} parent=11 // pred_fallthru
          _
        // Predicated region
        $region17: #{tpu_custom_call.1} parent=11 // pred_check
          %p237 = pneg %p105
        $region18: #{tpu_custom_call.1} parent=11 // pred_check_branch
          %239 = sbr.rel (%p237) target = $region20
        $region19: #{tpu_custom_call.1} parent=11 // pred_region
          _
        $region20: #{tpu_custom_call.1} parent=11 // pred_fallthru
          _
        // Predicated region
        $region21: #{tpu_custom_call.1} parent=11 // pred_check
          %p240 = pneg %p126
        $region22: #{tpu_custom_call.1} parent=11 // pred_check_branch
          %242 = sbr.rel (%p240) target = $region24
        $region23: #{tpu_custom_call.1} parent=11 // pred_region
          %244 = vsyncadd [#allocation6], 0
          %s245 = sshll.u32 %s3, 4
          %s246 = int_to_ptr.hbm [resolvable:$true] %s245
          %s247 = sshll.u32 [#allocation7], 4
          %s248 = int_to_ptr.vmem [resolvable:$true] %s247
          %253 = dma.hbm_to_vmem [thread:$0]  %s246, 256, %s248, [#allocation6], 64, 64, 4
        $region24: #{tpu_custom_call.1} parent=11 // pred_fallthru
          _
      $region12: #{tpu_custom_call.1} parent=5 // pred_fallthru
        _
      %p254 = scmp.lt.s32.totalorder %s23, 2
      // Predicated region
      $region25: #{tpu_custom_call.1} parent=5 // pred_check
        %p255 = pneg %p254
      $region26: #{tpu_custom_call.1} parent=5 // pred_check_branch
        %257 = sbr.rel (%p255) target = $region28
      $region27: #{tpu_custom_call.1} parent=5 // pred_region
        // Predicated region
        $region29: #{tpu_custom_call.1} parent=27 // pred_check
          %p258 = pneg %p57
        $region30: #{tpu_custom_call.1} parent=27 // pred_check_branch
          %260 = sbr.rel (%p258) target = $region32
        $region31: #{tpu_custom_call.1} parent=27 // pred_region
          %s261 = sand.u32 %s47, 1
          %s262 = scalar_lea.sflag [#allocation3], %s261
          %s263 = sand.u32 %s47, 1
          %s264 = smul.addr %s263, 8
          %s265 = scalar_lea.vmem [#allocation2], %s264
          %267 = vsyncadd %s262, 0
          %s268 = sadd.s32 %s31, %s30
          %s269 = smul.addr %s268, 8
          %s270 = scalar_lea.hbm %s0, %s269
          %s272 = sshll.u32 %s270, 4
          %s273 = int_to_ptr.hbm [resolvable:$true] %s272
          %s274 = sshll.u32 %s265, 4
          %s275 = int_to_ptr.vmem [resolvable:$true] %s274
          %277 = dma.hbm_to_vmem [thread:$0]  %s273, 128, %s275, %s262
        $region32: #{tpu_custom_call.1} parent=27 // pred_fallthru
          _
      $region28: #{tpu_custom_call.1} parent=5 // pred_fallthru
        _
      %p278 = scmp.le.s32.totalorder 1, %s23
      %p279 = scmp.lt.s32.totalorder %s23, 3
      %p280 = pnand %p278, %p279
      %p281 = pneg %p280
      // Predicated region
      $region33: #{tpu_custom_call.1} parent=5 // pred_check
        _
      $region34: #{tpu_custom_call.1} parent=5 // pred_check_branch
        %283 = sbr.rel (%p280) target = $region36
      $region35: #{tpu_custom_call.1} parent=5 // pred_region
        %s284 = ssub.s32 %s23, 1
        %s285 = sand.u32 %s50, 1
        %s286 = scalar_lea.sflag [#allocation3], %s285
        %s287 = sand.u32 %s50, 1
        %s288 = smul.addr %s287, 8
        %s289 = scalar_lea.vmem [#allocation2], %s288
        // Predicated region
        $region37: #{tpu_custom_call.1} parent=35 // pred_check
          %p290 = pneg %p63
        $region38: #{tpu_custom_call.1} parent=35 // pred_check_branch
          %292 = sbr.rel (%p290) target = $region40
        $region39: #{tpu_custom_call.1} parent=35 // pred_region
          %294 = dma.done %s286, 128
        $region40: #{tpu_custom_call.1} parent=35 // pred_fallthru
          _
        // Predicated region
        $region41: #{tpu_custom_call.1} parent=35 // pred_check
          %p295 = pneg %p84
        $region42: #{tpu_custom_call.1} parent=35 // pred_check_branch
          %297 = sbr.rel (%p295) target = $region44
        $region43: #{tpu_custom_call.1} parent=35 // pred_region
          %299 = dma.done [#allocation6], 16
        $region44: #{tpu_custom_call.1} parent=35 // pred_fallthru
          _
        // Predicated region
        $region45: #{tpu_custom_call.1} parent=35 // pred_check
          %p300 = pneg %p126
        $region46: #{tpu_custom_call.1} parent=35 // pred_check_branch
          %302 = sbr.rel (%p300) target = $region48
        $region47: #{tpu_custom_call.1} parent=35 // pred_region
          %304 = dma.done [#allocation6], 256
        $region48: #{tpu_custom_call.1} parent=35 // pred_fallthru
          _
        %s305 = sand.u32 %s50, 1
        %s306 = scalar_lea.sflag [#allocation3], %s305
        %s307 = sand.u32 %s50, 1
        %s308 = smul.addr %s307, 8
        %s309 = scalar_lea.vmem [#allocation2], %s308
        %p310 = pneg %p63
        %p311 = pneg %p60
        %p312 = pneg %p84
        %p313 = pneg %p81
        %p314 = pneg %p105
        %p315 = pneg %p102
        %p316 = pneg %p126
        %p317 = pneg %p123
        %p318 = pneg %p154
        %p319 = pneg %p151
        %s320 = sand.u32 %s141, 1
        %s321 = scalar_lea.sflag [#allocation4], %s320
        %s322 = sand.u32 %s141, 1
        %s323 = smul.addr %s322, 4
        %s324 = scalar_lea.vmem [#allocation8], %s323
        %p325 = pneg %p182
        %p326 = pneg %p179
        %s327 = sand.u32 %s28, 1
        %s328 = scalar_lea.sflag [#allocation10], %s327
        %s329 = sand.u32 %s169, 1
        %s330 = smul.addr %s329, 4
        %s331 = scalar_lea.vmem [#allocation9], %s330
        %p332 = pneg %p210
        %p333 = pneg %p207
        %s334 = sand.u32 %s28, 1
        %s335 = scalar_lea.sflag [#allocation10], %s334
        %s336 = sand.u32 %s197, 1
        %s337 = smul.addr %s336, 4
        %s338 = scalar_lea.vmem [#allocation11], %s337
        %v340 = vld [vmem:[%s289] sm:$0xff]
        %v341 = vld [vmem:[#allocation5] sm:$0x1]
        %v342 = vld [vmem:[%s2] sm:$0x1]
        %vm343 = vcmask 261120
        %v344 = vsel %vm343, %v340, 0.0
        %345 = vadd.xlane.f32.xlu0 %v344
        %v346 = vpop.xlane.xlu0 %345
        %v347 = vrcp.pop 32.0
        %v348 = vmul.f32 32.0, %v347
        %v349 = vsub.f32 1.0, %v348
        %v350 = vmul.f32 %v347, %v349
        %v351 = vadd.f32 %v347, %v350
        %vm352 = vweird.f32 %v347
        %v353 = vsel %vm352, %v347, %v351
        %v354 = vmul.f32 %v346, %v353
        %v355 = vsub.f32 %v340, %v354
        %v356 = vmul.f32 %v355, %v355
        %v357 = vsel %vm343, %v356, 0.0
        %358 = vadd.xlane.f32.xlu0 %v357
        %v359 = vpop.xlane.xlu0 %358
        %v360 = vmul.f32 %v359, %v353
        %v361 = vadd.f32 %v360, 1e-05
        %v362 = vrsqrt.pop %v361
        %v363 = vmul.f32 %v362, %v361
        %v364 = vmul.f32 %v363, %v362
        %v365 = vmul.f32 0.5, %v364
        %v366 = vsub.f32 1.5, %v365
        %v367 = vmul.f32 %v362, %v366
        %vm368 = vweird.f32 %v361
        %vm369 = vweird.f32 %v362
        %vm370 = vmor %vm368, %vm369
        %v371 = vsel %vm370, %v362, %v367
        %v372 = vmul.f32 %v355, %v371
        %v374 = vperm.slane %v341, 0
        %v376 = vmul.f32 %v372, %v374
        %v378 = vperm.slane %v342, 0
        %v380 = vadd.f32 %v376, %v378
        %v381 = vpack.c.bf16 %v380, %v380
        %v382 = vld [vmem:[#allocation7] sm:$0xf]
        %v383 = vld [vmem:[#allocation7 + $0x4] sm:$0xf]
        %v384 = vld [vmem:[#allocation7 + $0x8] sm:$0xf]
        %v385 = vld [vmem:[#allocation7 + $0xc] sm:$0xf]
        %v390 = vunpack.c.l.b16 %v382
        %v391 = vunpack.c.l.b16 %v383
        %v392 = vunpack.c.l.b16 %v384
        %v393 = vunpack.c.l.b16 %v385
        %v394 = vpack.c.b16 %v391, %v390
        %v395 = vpack.c.b16 %v393, %v392
        %v399 = vsel %vm343, %v381, 0
        %401 = vmatpush.bf16.msra.mxu0 0
        %402 = vmatpush.bf16.msra.mxu0 0
        %403 = vmatpush.bf16.msra.mxu0 0
        %404 = vmatpush.bf16.msra.mxu0 0
        %405 = vmatpush.bf16.msra.mxu0 0
        %406 = vmatpush.bf16.msra.mxu0 0
        %407 = vmatpush.bf16.msra.mxu0 %v395
        %408 = vmatpush.bf16.msra.mxu0 %v394
        %409 = vmatmul.bf16.gmra.mxu0 %v399
        %v410 = vpop.f32.mrf.mxu0
        %v411 = vadd.f32 0.0, %v410
        %v412 = vpop.f32.mrf.mxu0
        %413 = vdwg.mxu0
        %v414 = vpack.c.bf16 %v411, %v411
        %vm415 = vcmask 257024
        %416 = vst.msk [vmem:[%s324] sm:$0xf] %vm415, %v414
        %418 = vrot.lane.b32.xlu0 %v414, 96
        %v419 = vpop.permute.xlu0 %418
        %421 = vst.msk [vmem:[%s331] sm:$0xf] %vm415, %v419
        %422 = vrot.lane.b32.xlu0 %v414, 64
        %v423 = vpop.permute.xlu0 %422
        %425 = vst.msk [vmem:[%s338] sm:$0xf] %vm415, %v423
        %s426 = sand.u32 %s141, 1
        %s427 = scalar_lea.sflag [#allocation4], %s426
        %s428 = sand.u32 %s141, 1
        %s429 = smul.addr %s428, 4
        %s430 = scalar_lea.vmem [#allocation8], %s429
        %s431 = sand.u32 %s28, 1
        %s432 = scalar_lea.sflag [#allocation10], %s431
        %s433 = sand.u32 %s169, 1
        %s434 = smul.addr %s433, 4
        %s435 = scalar_lea.vmem [#allocation9], %s434
        %s436 = sand.u32 %s28, 1
        %s437 = scalar_lea.sflag [#allocation10], %s436
        %s438 = sand.u32 %s197, 1
        %s439 = smul.addr %s438, 4
        %s440 = scalar_lea.vmem [#allocation11], %s439
        // Predicated region
        $region49: #{tpu_custom_call.1} parent=35 // pred_check
          %p441 = pneg %p151
        $region50: #{tpu_custom_call.1} parent=35 // pred_check_branch
          %443 = sbr.rel (%p441) target = $region52
        $region51: #{tpu_custom_call.1} parent=35 // pred_region
          %445 = vsyncadd %s427, 0
          %s446 = sadd.s32 %s33, %s32
          %s447 = smul.addr %s446, 4
          %s448 = scalar_lea.hbm %s4, %s447
          %s450 = sshll.u32 %s430, 4
          %s451 = int_to_ptr.vmem [resolvable:$true] %s450
          %s452 = sshll.u32 %s448, 4
          %s453 = int_to_ptr.hbm [resolvable:$true] %s452
          %455 = dma.vmem_to_hbm [thread:$0]  %s451, 64, %s453, %s427
        $region52: #{tpu_custom_call.1} parent=35 // pred_fallthru
          _
        // Predicated region
        $region53: #{tpu_custom_call.1} parent=35 // pred_check
          %p456 = pneg %p179
        $region54: #{tpu_custom_call.1} parent=35 // pred_check_branch
          %458 = sbr.rel (%p456) target = $region56
        $region55: #{tpu_custom_call.1} parent=35 // pred_region
          %460 = vsyncadd %s432, 0
          %s461 = sadd.s32 %s33, %s32
          %s462 = smul.addr %s461, 4
          %s463 = scalar_lea.hbm %s5, %s462
          %s465 = sshll.u32 %s435, 4
          %s466 = int_to_ptr.vmem [resolvable:$true] %s465
          %s467 = sshll.u32 %s463, 4
          %s468 = int_to_ptr.hbm [resolvable:$true] %s467
          %470 = dma.vmem_to_hbm [thread:$0]  %s466, 64, %s468, %s432
        $region56: #{tpu_custom_call.1} parent=35 // pred_fallthru
          _
        // Predicated region
        $region57: #{tpu_custom_call.1} parent=35 // pred_check
          %p471 = pneg %p207
        $region58: #{tpu_custom_call.1} parent=35 // pred_check_branch
          %473 = sbr.rel (%p471) target = $region60
        $region59: #{tpu_custom_call.1} parent=35 // pred_region
          %475 = vsyncadd %s437, 0
          %s476 = sadd.s32 %s33, %s32
          %s477 = smul.addr %s476, 4
          %s478 = scalar_lea.hbm %s6, %s477
          %s480 = sshll.u32 %s440, 4
          %s481 = int_to_ptr.vmem [resolvable:$true] %s480
          %s482 = sshll.u32 %s478, 4
          %s483 = int_to_ptr.hbm [resolvable:$true] %s482
          %485 = dma.vmem_to_hbm [thread:$0]  %s481, 64, %s483, %s437
        $region60: #{tpu_custom_call.1} parent=35 // pred_fallthru
          _
      $region36: #{tpu_custom_call.1} parent=5 // pred_fallthru
        _
      %p486 = scmp.le.s32.totalorder 2, %s23
      // Predicated region
      $region61: #{tpu_custom_call.1} parent=5 // pred_check
        %p487 = pneg %p486
      $region62: #{tpu_custom_call.1} parent=5 // pred_check_branch
        %489 = sbr.rel (%p487) target = $region64
      $region63: #{tpu_custom_call.1} parent=5 // pred_region
        %s490 = ssub.s32 %s23, 2
        // Predicated region
        $region65: #{tpu_custom_call.1} parent=63 // pred_check
          %p491 = pneg %p157
        $region66: #{tpu_custom_call.1} parent=63 // pred_check_branch
          %493 = sbr.rel (%p491) target = $region68
        $region67: #{tpu_custom_call.1} parent=63 // pred_region
          %s494 = sand.u32 %s142, 1
          %s495 = scalar_lea.sflag [#allocation4], %s494
          %s496 = sand.u32 %s142, 1
          %s497 = smul.addr %s496, 4
          %s498 = scalar_lea.vmem [#allocation8], %s497
          %500 = dma.done %s495, 64
        $region68: #{tpu_custom_call.1} parent=63 // pred_fallthru
          _
        // Predicated region
        $region69: #{tpu_custom_call.1} parent=63 // pred_check
          %p501 = pneg %p185
        $region70: #{tpu_custom_call.1} parent=63 // pred_check_branch
          %503 = sbr.rel (%p501) target = $region72
        $region71: #{tpu_custom_call.1} parent=63 // pred_region
          %s504 = sand.u32 %s29, 1
          %s505 = scalar_lea.sflag [#allocation10], %s504
          %s506 = sand.u32 %s170, 1
          %s507 = smul.addr %s506, 4
          %s508 = scalar_lea.vmem [#allocation9], %s507
          %510 = dma.done %s505, 64
        $region72: #{tpu_custom_call.1} parent=63 // pred_fallthru
          _
        // Predicated region
        $region73: #{tpu_custom_call.1} parent=63 // pred_check
          %p511 = pneg %p213
        $region74: #{tpu_custom_call.1} parent=63 // pred_check_branch
          %513 = sbr.rel (%p511) target = $region76
        $region75: #{tpu_custom_call.1} parent=63 // pred_region
          %s514 = sand.u32 %s29, 1
          %s515 = scalar_lea.sflag [#allocation10], %s514
          %s516 = sand.u32 %s198, 1
          %s517 = smul.addr %s516, 4
          %s518 = scalar_lea.vmem [#allocation11], %s517
          %520 = dma.done %s515, 64
        $region76: #{tpu_custom_call.1} parent=63 // pred_fallthru
          _
      $region64: #{tpu_custom_call.1} parent=5 // pred_fallthru
        _
    $region6: #{tpu_custom_call.1} parent=1 // loop_footer
      %s27 = sadd.s32 1, %s23
    $region7: #{tpu_custom_call.1} parent=1 // loop_footer_branch
      %22 = sbr.rel target = $region3
    $region8: #{tpu_custom_call.1} parent=1 // loop_exit
      _
    %521 = vsyncpa [#allocation3], 1
    %s522 = scalar_lea.sflag [#allocation3], 1
    %523 = vsyncpa %s522, 1
    %524 = vsyncpa [#allocation6], 1
    %525 = vsyncpa [#allocation4], 1
    %s526 = scalar_lea.sflag [#allocation4], 1
    %527 = vsyncpa %s526, 1
    %528 = vsyncpa [#allocation10], 1
    %s529 = scalar_lea.sflag [#allocation10], 1
    %530 = vsyncpa %s529, 1

</llo_original>
